<compile_context>
chip_gen: v6e
topology: v6e:2x2x1
jax: 0.10.0
libtpu: 0.0.40
codegen_flags: <defaults>
</compile_context>

<pallas_src>
import functools

import jax
import jax.numpy as jnp
from jax.experimental import pallas as pl
from jax.experimental.pallas import tpu as pltpu


def _rand_bernoulli_half_hash(shape, seed_u32, col0_u32):
    """Stateless Bernoulli(0.5) in {0.0, 1.0} via a lowbias32 hash (fallback)."""
    rows = jax.lax.broadcasted_iota(jnp.int32, shape, 0).astype(jnp.uint32)
    cols = jax.lax.broadcasted_iota(jnp.int32, shape, 1).astype(jnp.uint32)
    x = seed_u32 + (cols + col0_u32) * jnp.uint32(0x9E3779B9) \
        + rows * jnp.uint32(0x85EBCA77)
    x = x ^ (x >> 16)
    x = x * jnp.uint32(0x7FEB352D)
    x = x ^ (x >> 15)
    x = x * jnp.uint32(0x846CA68B)
    x = x ^ (x >> 16)
    return (x & jnp.uint32(1)).astype(jnp.float32)


def _interp_mask_kernel(seed_ref, mask_ref, out_ref, *,
                        evaluate: bool, use_hw_prng: bool, block_cols: int):
    # mask_ref / out_ref are (K, block_cols): modalities on sublanes, nodes on
    # the 128-lane axis -> per-node reductions over axis=0, lane-dense stores.
    mask = mask_ref[...]
    k = mask.shape[0]
    mask_colsum = jnp.sum(mask, axis=0, keepdims=True)  # modalities avail/node

    if evaluate:
        # torch random_(1, 2) -> random_mask == 1 everywhere, so m == mask.
        m = mask
        m_colsum = mask_colsum
    else:
        if use_hw_prng:
            # Hardware PRNG; seed mixed with the block index (reproducible for
            # a fixed block_cols; stream differs from the software-hash path).
            pltpu.prng_seed(seed_ref[0] + pl.program_id(0))
            bits = (pltpu.prng_random_bits(mask.shape) & 1).astype(jnp.float32)
        else:
            seed = seed_ref[0].astype(jnp.uint32)
            col0 = (pl.program_id(0) * block_cols).astype(jnp.uint32)
            bits = _rand_bernoulli_half_hash(mask.shape, seed, col0)

        # PyTorch's  bits + 1/(1+sum(bits))**20 + 1/(sum(mask))**20, .int(),
        # x/(x+1e-10)  collapses (for binary masks) to: keep everything when no
        # bit survived for a node or when <=1 modality is available, otherwise
        # keep exactly the sampled bits.  (sum(mask)==0 nodes end up uniform
        # 1/K below, matching the -1e10 softmax behaviour.)
        bits_colsum = jnp.sum(bits, axis=0, keepdims=True)
        keep_all = jnp.logical_or(bits_colsum == 0.0, mask_colsum <= 1.0)
        m = mask * jnp.where(keep_all, 1.0, bits)
        m_colsum = jnp.sum(m, axis=0, keepdims=True)

    # softmax(m + (1-m)*(-1e10)) over modalities with binary m is exactly
    # m / sum(m); a fully-dropped node degenerates to uniform 1/K (as in torch).
    denom = jnp.where(m_colsum == 0.0, 1.0, m_colsum)
    inv = pl.reciprocal(denom, approx=True)            # EUP slot, not VALU
    out_ref[...] = jnp.where(m_colsum == 0.0, 1.0 / k, m * inv)


def _pick_block_cols(n: int) -> int:
    # Big lane-dense tiles: per-grid-step overhead (~0.35us) dominates small
    # tiles, and at K~4-8 even a 65536-wide f32 block is only ~1-2 MiB, far
    # under the scoped-VMEM limit on all generations.
    if n <= 16384:
        return n
    for cand in (65536, 32768, 16384):
        if n % cand == 0 and n // cand >= 2:   # >=2 steps -> v7x uses both TCs
            return cand
    return n  # fall back to one full-width block


def interp_forward(net_scales, mask, idxs, seed, *,
                   evaluate: bool = False,
                   temperature: float = 1.0,
                   block_cols: int | None = None,
                   modality_major: bool = False,
                   use_hw_prng: bool | None = None):
    """JAX/Pallas equivalent of Interp.forward(mask, idxs, evaluate).

    mask: binary availability mask, shape (N, K) by default (PyTorch layout),
          or (K, N) when modality_major=True (preferred hot path: avoids two
          full HBM transpose passes).
    Returns (softmax(net_scales/T)[:, idxs], renormalized mask in the same
    layout that was passed in).
    """
    if use_hw_prng is None:
        use_hw_prng = jax.default_backend() == "tpu"

    # net_scales path: ~tens of bytes; plain JAX so XLA fuses div+softmax+take.
    scales_sel = jax.nn.softmax(net_scales / temperature, axis=-1)[:, idxs]

    mask_t = mask if modality_major else mask.T        # (K, N), nodes on lanes
    k, n = mask_t.shape

    if block_cols is None:
        block_cols = _pick_block_cols(n)
    if block_cols != n:
        assert n % block_cols == 0 and block_cols % 128 == 0, (
            "block_cols must divide N and be a multiple of 128")

    seed_arr = jnp.asarray([seed], dtype=jnp.int32)
    kernel = functools.partial(_interp_mask_kernel, evaluate=evaluate,
                               use_hw_prng=use_hw_prng, block_cols=block_cols)

    mask_out_t = pl.pallas_call(
        kernel,
        out_shape=jax.ShapeDtypeStruct((k, n), jnp.float32),
        grid_spec=pltpu.PrefetchScalarGridSpec(
            num_scalar_prefetch=1,
            grid=(n // block_cols,),
            in_specs=[pl.BlockSpec((k, block_cols), lambda i, seed: (0, i))],
            out_specs=pl.BlockSpec((k, block_cols), lambda i, seed: (0, i)),
        ),
        compiler_params=pltpu.CompilerParams(
            dimension_semantics=("parallel",)),        # blocks independent
        cost_estimate=pl.CostEstimate(
            flops=10 * n * k,
            transcendentals=2 * n,                     # rcp (+ prng) per column
            bytes_accessed=2 * n * k * 4),
    )(seed_arr, mask_t)

    return scales_sel, (mask_out_t if modality_major else mask_out_t.T)


if __name__ == "__main__":
    key = jax.random.PRNGKey(0)

    n_modalities = 6                                   # parameter width
    idxs = jnp.array([0, 2, 3, 5], dtype=jnp.int32)    # selected modalities
    k = int(idxs.shape[0])
    n_nodes = 256

    # __init__: net_scales = ones / n_modalities, shape (1, n_modalities)
    net_scales = jnp.full((1, n_modalities), 1.0 / n_modalities, jnp.float32)

    # binary node/modality availability in the preferred modality-major layout;
    # guarantee >=1 modality per node.
    kmask, _ = jax.random.split(key)
    mask_kn = jax.random.bernoulli(
        kmask, p=0.7, shape=(k, n_nodes)).astype(jnp.float32)
    mask_kn = mask_kn.at[0, :].set(1.0)

    # ---- training path (stochastic dropout, HW PRNG) ----
    scales_out, mask_out_kn = interp_forward(
        net_scales, mask_kn, idxs, seed=1234, evaluate=False, modality_major=True)
    jax.block_until_ready(scales_out)
    jax.block_until_ready(mask_out_kn)
    assert scales_out.shape == (1, k)
    assert mask_out_kn.shape == (k, n_nodes)
    assert bool(jnp.all(jnp.isfinite(mask_out_kn)))
    assert bool(jnp.all((mask_out_kn >= 0.0) & (mask_out_kn <= 1.0 + 1e-3)))
    assert bool(jnp.allclose(jnp.sum(mask_out_kn, axis=0), 1.0, atol=2e-3))

    # ---- evaluate path (deterministic) vs. pure-JAX reference of the torch math ----
    mask_nk = mask_kn.T
    scales_eval, mask_eval_nk = interp_forward(
        net_scales, mask_nk, idxs, seed=0, evaluate=True)   # default (N, K) layout

    rm = jnp.ones_like(mask_nk)
    rm = rm + 1.0 / (1.0 + jnp.sum(rm, -1, keepdims=True)) ** 20
    rm = rm + 1.0 / (jnp.sum(mask_nk, -1, keepdims=True) ** 20)
    rm = rm.astype(jnp.int32).astype(jnp.float32)
    rm = rm / (rm + 1e-10)
    m_ref = mask_nk * rm
    ref_mask = jax.nn.softmax(m_ref + (1.0 - m_ref) * (-1e10), axis=-1)
    ref_scales = jax.nn.softmax(net_scales / 1.0, axis=-1)[:, idxs]
    jax.block_until_ready(mask_eval_nk)
    assert bool(jnp.allclose(mask_eval_nk, ref_mask, atol=2e-3))
    assert bool(jnp.allclose(scales_eval, ref_scales, atol=1e-6))

    # modality-major call gives the same result with no wrapper transposes
    _, mask_eval_kn = interp_forward(
        net_scales, mask_kn, idxs, seed=0, evaluate=True, modality_major=True)
    jax.block_until_ready(mask_eval_kn)
    assert bool(jnp.allclose(mask_eval_kn, mask_eval_nk.T, atol=1e-6))

    print("KERNEL_OK")
</pallas_src>

<mosaic_0001>
module attributes {stable_mosaic.version = 11 : i64} {
  func.func @_interp_mask_kernel(%arg0: i32, %arg1: memref<1xi32, #tpu.memory_space<smem>>, %arg2: memref<4x256xf32, #tpu.memory_space<vmem>>, %arg3: memref<4x256xf32, #tpu.memory_space<vmem>>) attributes {dimension_semantics = [#tpu.dimension_semantics<parallel>], iteration_bounds = array<i64: 1>, scalar_prefetch = 1 : i64, scratch_operands = 0 : i64, tpu.core_type = #tpu.core_type<tc>, window_params = [{transform_indices = @transform_0, window_bounds = array<i64: 4, 256>}, {transform_indices = @transform_1, window_bounds = array<i64: 4, 256>}]} {
    %c0 = arith.constant 0 : index
    %c0_0 = arith.constant 0 : index
    %0 = vector.load %arg2[%c0, %c0_0] : memref<4x256xf32, #tpu.memory_space<vmem>>, vector<4x256xf32>
    %cst = arith.constant dense<0.000000e+00> : vector<256xf32>
    %1 = vector.multi_reduction <add>, %0, %cst [0] : vector<4x256xf32> to vector<256xf32>
    %2 = vector.shape_cast %1 : vector<256xf32> to vector<1x256xf32>
    %c0_1 = arith.constant 0 : index
    %3 = memref.load %arg1[%c0_1] : memref<1xi32, #tpu.memory_space<smem>>
    %c256_i32 = arith.constant 256 : i32
    %4 = arith.muli %arg0, %c256_i32 : i32
    %5 = tpu.iota {dimensions = array<i32: 0>} : vector<4x256xi32>
    %6 = tpu.iota {dimensions = array<i32: 1>} : vector<4x256xi32>
    %7 = vector.broadcast %4 : i32 to vector<4x256xi32>
    %8 = arith.addi %6, %7 : vector<4x256xi32>
    %c-1640531527_i32 = arith.constant -1640531527 : i32
    %9 = vector.broadcast %c-1640531527_i32 : i32 to vector<4x256xi32>
    %10 = arith.muli %8, %9 : vector<4x256xi32>
    %11 = vector.broadcast %3 : i32 to vector<4x256xi32>
    %12 = arith.addi %11, %10 : vector<4x256xi32>
    %c-2048144777_i32 = arith.constant -2048144777 : i32
    %13 = vector.broadcast %c-2048144777_i32 : i32 to vector<4x256xi32>
    %14 = arith.muli %5, %13 : vector<4x256xi32>
    %15 = arith.addi %12, %14 : vector<4x256xi32>
    %c16_i32 = arith.constant 16 : i32
    %16 = vector.broadcast %c16_i32 : i32 to vector<4x256xi32>
    %17 = arith.shrui %15, %16 : vector<4x256xi32>
    %18 = arith.xori %15, %17 : vector<4x256xi32>
    %c2146121005_i32 = arith.constant 2146121005 : i32
    %19 = vector.broadcast %c2146121005_i32 : i32 to vector<4x256xi32>
    %20 = arith.muli %18, %19 : vector<4x256xi32>
    %c15_i32 = arith.constant 15 : i32
    %21 = vector.broadcast %c15_i32 : i32 to vector<4x256xi32>
    %22 = arith.shrui %20, %21 : vector<4x256xi32>
    %23 = arith.xori %20, %22 : vector<4x256xi32>
    %c-2073254261_i32 = arith.constant -2073254261 : i32
    %24 = vector.broadcast %c-2073254261_i32 : i32 to vector<4x256xi32>
    %25 = arith.muli %23, %24 : vector<4x256xi32>
    %c16_i32_2 = arith.constant 16 : i32
    %26 = vector.broadcast %c16_i32_2 : i32 to vector<4x256xi32>
    %27 = arith.shrui %25, %26 : vector<4x256xi32>
    %28 = arith.xori %25, %27 : vector<4x256xi32>
    %c1_i32 = arith.constant 1 : i32
    %29 = vector.broadcast %c1_i32 : i32 to vector<4x256xi32>
    %30 = arith.andi %28, %29 : vector<4x256xi32>
    %31 = arith.uitofp %30 : vector<4x256xi32> to vector<4x256xf32>
    %cst_3 = arith.constant dense<0.000000e+00> : vector<256xf32>
    %32 = vector.multi_reduction <add>, %31, %cst_3 [0] : vector<4x256xf32> to vector<256xf32>
    %33 = vector.shape_cast %32 : vector<256xf32> to vector<1x256xf32>
    %cst_4 = arith.constant 0.000000e+00 : f32
    %34 = vector.broadcast %cst_4 : f32 to vector<1x256xf32>
    %35 = arith.cmpf oeq, %33, %34 : vector<1x256xf32>
    %cst_5 = arith.constant 1.000000e+00 : f32
    %36 = vector.broadcast %cst_5 : f32 to vector<1x256xf32>
    %37 = arith.cmpf ole, %2, %36 : vector<1x256xf32>
    %38 = arith.ori %35, %37 : vector<1x256xi1>
    %cst_6 = arith.constant 1.000000e+00 : f32
    %39 = vector.shape_cast %38 : vector<1x256xi1> to vector<1x256xi1>
    %40 = vector.broadcast %39 : vector<1x256xi1> to vector<4x256xi1>
    %41 = vector.broadcast %cst_6 : f32 to vector<4x256xf32>
    %42 = arith.select %40, %41, %31 : vector<4x256xi1>, vector<4x256xf32>
    %43 = arith.mulf %0, %42 : vector<4x256xf32>
    %cst_7 = arith.constant dense<0.000000e+00> : vector<256xf32>
    %44 = vector.multi_reduction <add>, %43, %cst_7 [0] : vector<4x256xf32> to vector<256xf32>
    %45 = vector.shape_cast %44 : vector<256xf32> to vector<1x256xf32>
    %cst_8 = arith.constant 0.000000e+00 : f32
    %46 = vector.broadcast %cst_8 : f32 to vector<1x256xf32>
    %47 = arith.cmpf oeq, %45, %46 : vector<1x256xf32>
    %cst_9 = arith.constant 1.000000e+00 : f32
    %48 = vector.broadcast %cst_9 : f32 to vector<1x256xf32>
    %49 = arith.select %47, %48, %45 : vector<1x256xi1>, vector<1x256xf32>
    %50 = tpu.reciprocal %49 {approx = true} : vector<1x256xf32> -> vector<1x256xf32>
    %cst_10 = arith.constant 0.000000e+00 : f32
    %51 = vector.broadcast %cst_10 : f32 to vector<1x256xf32>
    %52 = arith.cmpf oeq, %45, %51 : vector<1x256xf32>
    %53 = vector.broadcast %50 : vector<1x256xf32> to vector<4x256xf32>
    %54 = arith.mulf %43, %53 : vector<4x256xf32>
    %cst_11 = arith.constant 2.500000e-01 : f32
    %55 = vector.shape_cast %52 : vector<1x256xi1> to vector<1x256xi1>
    %56 = vector.broadcast %55 : vector<1x256xi1> to vector<4x256xi1>
    %57 = vector.broadcast %cst_11 : f32 to vector<4x256xf32>
    %58 = arith.select %56, %57, %54 : vector<4x256xi1>, vector<4x256xf32>
    %c0_12 = arith.constant 0 : index
    %c0_13 = arith.constant 0 : index
    %59 = vector.load %arg3[%c0_12, %c0_13] : memref<4x256xf32, #tpu.memory_space<vmem>>, vector<4x256xf32>
    tpu.vector_store %arg3[%c0_12, %c0_13], %58 {strides = array<i32>} : memref<4x256xf32, #tpu.memory_space<vmem>>, vector<4x256xf32>,
    return
  }
  func.func @transform_0(%arg0: i32, %arg1: memref<1xi32, #tpu.memory_space<smem>>) -> (i32, i32) {
    %c0_i32 = arith.constant 0 : i32
    %c0_i32_0 = arith.constant 0 : i32
    return %c0_i32, %arg0 : i32, i32
  }
  func.func @transform_1(%arg0: i32, %arg1: memref<1xi32, #tpu.memory_space<smem>>) -> (i32, i32) {
    %c0_i32 = arith.constant 0 : i32
    %c0_i32_0 = arith.constant 0 : i32
    return %c0_i32, %arg0 : i32, i32
  }
}

</mosaic_0001>

<llo_original>
// kernel: tpu_custom_call.1
$region0: #{tpu_custom_call.1}
  #allocation0 [shape = 'u32[]', space=smem, size = 0x4, offset = 0x4, fixed_abs, tag = 'smem constant byte address 0x4 - core index']
  #allocation1 [shape = 'u32[144,128]{1,0:T(1,128)}', space=vmem, size = 0x12000, scoped, tag = 'internal scratch']
  #allocation2 [shape = 's32[1]{0}', space=sflag, size = 0x4, scoped, tag = 'scoped memory for tpu_custom_call.1']
  #allocation3 [shape = 's32[1]{0:T(128)S(6)}', space=smem, size = 0x200, scoped, tag = 'prefetched SMEM operand 0']
  %s0 = inlined_call_operand.<no memory space> [shape: s32[1], index: 0, kind: input, shape index: {}]
  %s1 = inlined_call_operand.hbm [shape: f32[4,256], index: 1, kind: input, shape index: {}]
  %s2 = inlined_call_operand.hbm [shape: f32[4,256], index: 2, kind: output, shape index: {}]
  %s3 = sld [smem:[#allocation0]]
  $region18: #{tpu_custom_call.1} parent=0
    _
  %s5 = ssub.s32 1, %s3
  %s6 = scalar_select 0, %s5, %s3
  %7 = sst [smem:[#allocation3]] %s0
  $region1: #{tpu_custom_call.1} parent=0
    #allocation4 [shape = 'u8[4096]{0}', space=vmem, size = 0x1000, scoped, tag = 'input window, operand 1, single buffered']
    #allocation5 [shape = 's32[1]{0}', space=sflag, size = 0x4, scoped, tag = 'scoped memory for tpu_custom_call.1']
    #allocation6 [shape = 's32[1]{0}', space=sflag, size = 0x4, scoped, tag = 'scoped memory for tpu_custom_call.1']
    #allocation7 [shape = 'u8[4096]{0}', space=vmem, size = 0x1000, scoped, tag = 'output window, operand 0, single buffered']
    %8 = vsyncpa [#allocation5], 0
    %9 = vsyncpa [#allocation6], 0
    // Predicated region
    $region2: #{tpu_custom_call.1} parent=1 // pred_check
      _
    $region3: #{tpu_custom_call.1} parent=1 // pred_check_branch
      %11 = sbr.rel (0) target = $region5
    $region4: #{tpu_custom_call.1} parent=1 // pred_region
      %s13 = ssub.s32 128, 128
      %14 = vsyncadd [#allocation5], %s13
      %s16 = sshll.u32 [#allocation4], 4
      %s17 = int_to_ptr.vmem [resolvable:$true] %s16
      %19 = dma.hbm_to_vmem [thread:$0]  %s1, 128, %s17, [#allocation5]
    $region5: #{tpu_custom_call.1} parent=1 // pred_fallthru
      _
    // Predicated region
    $region6: #{tpu_custom_call.1} parent=1 // pred_check
      _
    $region7: #{tpu_custom_call.1} parent=1 // pred_check_branch
      %21 = sbr.rel (0) target = $region9
    $region8: #{tpu_custom_call.1} parent=1 // pred_region
      %22 = dma.done [#allocation5], 128
    $region9: #{tpu_custom_call.1} parent=1 // pred_fallthru
      _
    %v23 = vld [vmem:[#allocation4] sm:$0xff]
    %v25 = vcombine.high %v23, %v23
    %vm27 = vcmask 1043456
    %v28 = vsel %vm27, %v23, 0.0
    %v29 = vrot.slane %v28, 4
    %v30 = vadd.f32 %v28, %v29
    %v31 = vrot.slane %v30, 2
    %v32 = vadd.f32 %v30, %v31
    %v33 = vrot.slane %v32, 1
    %v34 = vadd.f32 %v32, %v33
    %v35 = vsel %vm27, %v25, 0.0
    %v36 = vrot.slane %v35, 4
    %v37 = vadd.f32 %v35, %v36
    %v38 = vrot.slane %v37, 2
    %v39 = vadd.f32 %v37, %v38
    %v40 = vrot.slane %v39, 1
    %v41 = vadd.f32 %v39, %v40
    %s42 = sld [smem:[#allocation3]]
    %s43 = smul.u32 0, 256
    %v44 = vlaneseq
    %v45 = vshrl.u32 %v44, 7
    %v46 = vlaneseq
    %v47 = vand.u32 %v46, 127
    %v48 = vadd.s32 %v47, 128
    %v49 = vstv %s43
    %v50 = vadd.s32 %v47, %v49
    %v51 = vadd.s32 %v48, %v49
    %v52 = vmul.u32 %v50, 2654435769
    %v53 = vmul.u32 %v51, 2654435769
    %v54 = vstv %s42
    %v55 = vadd.s32 %v54, %v52
    %v56 = vadd.s32 %v54, %v53
    %v57 = vmul.u32 %v45, 2246822519
    %v58 = vadd.s32 %v55, %v57
    %v59 = vadd.s32 %v56, %v57
    %v60 = vshrl.u32 %v58, 16
    %v61 = vshrl.u32 %v59, 16
    %v62 = vxor.u32 %v58, %v60
    %v63 = vxor.u32 %v59, %v61
    %v64 = vmul.u32 %v62, 2146121005
    %v65 = vmul.u32 %v63, 2146121005
    %v66 = vshrl.u32 %v64, 15
    %v67 = vshrl.u32 %v65, 15
    %v68 = vxor.u32 %v64, %v66
    %v69 = vxor.u32 %v65, %v67
    %v70 = vmul.u32 %v68, 2221713035
    %v71 = vmul.u32 %v69, 2221713035
    %v72 = vshrl.u32 %v70, 16
    %v73 = vshrl.u32 %v71, 16
    %v74 = vxor.u32 %v70, %v72
    %v75 = vxor.u32 %v71, %v73
    %v76 = vand.u32 %v74, 1
    %v77 = vand.u32 %v75, 1
    %v78 = vshrl.u32 %v76, 16
    %v79 = vand.u32 %v76, 65535
    %v80 = vcvt.s32.f32 %v78
    %v81 = vmul.f32 %v80, 65536.0
    %v82 = vcvt.s32.f32 %v79
    %v83 = vadd.f32 %v81, %v82
    %v84 = vshrl.u32 %v77, 16
    %v85 = vand.u32 %v77, 65535
    %v86 = vcvt.s32.f32 %v84
    %v87 = vmul.f32 %v86, 65536.0
    %v88 = vcvt.s32.f32 %v85
    %v89 = vadd.f32 %v87, %v88
    %v90 = vsel %vm27, %v83, 0.0
    %v91 = vrot.slane %v90, 4
    %v92 = vadd.f32 %v90, %v91
    %v93 = vrot.slane %v92, 2
    %v94 = vadd.f32 %v92, %v93
    %v95 = vrot.slane %v94, 1
    %v96 = vadd.f32 %v94, %v95
    %v97 = vsel %vm27, %v89, 0.0
    %v98 = vrot.slane %v97, 4
    %v99 = vadd.f32 %v97, %v98
    %v100 = vrot.slane %v99, 2
    %v101 = vadd.f32 %v99, %v100
    %v102 = vrot.slane %v101, 1
    %v103 = vadd.f32 %v101, %v102
    %vm104 = vcmp.eq.f32.partialorder %v96, 0.0
    %vm105 = vcmp.eq.f32.partialorder %v103, 0.0
    %vm106 = vcmp.le.f32.partialorder %v34, 1.0
    %vm107 = vcmp.le.f32.partialorder %v41, 1.0
    %vm108 = vmor %vm104, %vm106
    %vm109 = vmor %vm105, %vm107
    %v110 = vsel %vm108, 1, 0
    %v111 = vsel %vm109, 1, 0
    %vm112 = vcmp.eq.s32.totalorder %v110, 1
    %vm113 = vcmp.eq.s32.totalorder %v111, 1
    %v114 = vsel %vm112, 1.0, %v83
    %v115 = vsel %vm113, 1.0, %v89
    %v118 = vcombine.low %v114, %v115
    %v120 = vmul.f32 %v23, %v118
    %v122 = vcombine.high %v120, %v120
    %v124 = vsel %vm27, %v120, 0.0
    %v125 = vrot.slane %v124, 4
    %v126 = vadd.f32 %v124, %v125
    %v127 = vrot.slane %v126, 2
    %v128 = vadd.f32 %v126, %v127
    %v129 = vrot.slane %v128, 1
    %v130 = vadd.f32 %v128, %v129
    %v131 = vsel %vm27, %v122, 0.0
    %v132 = vrot.slane %v131, 4
    %v133 = vadd.f32 %v131, %v132
    %v134 = vrot.slane %v133, 2
    %v135 = vadd.f32 %v133, %v134
    %v136 = vrot.slane %v135, 1
    %v137 = vadd.f32 %v135, %v136
    %vm138 = vcmp.eq.f32.partialorder %v130, 0.0
    %vm139 = vcmp.eq.f32.partialorder %v137, 0.0
    %v140 = vsel %vm138, 1.0, %v130
    %v141 = vsel %vm139, 1.0, %v137
    %v142 = vrcp.pop %v140
    %v143 = vrcp.pop %v141
    %v146 = vcombine.low %v142, %v143
    %v148 = vmul.f32 %v120, %v146
    %v149 = vsel %vm138, 1, 0
    %v150 = vsel %vm139, 1, 0
    %vm151 = vcmp.eq.s32.totalorder %v149, 1
    %vm152 = vcmp.eq.s32.totalorder %v150, 1
    %v154 = vcombine.high %v148, %v148
    %v156 = vsel %vm151, 0.25, %v148
    %v157 = vsel %vm152, 0.25, %v154
    %v160 = vcombine.low %v156, %v157
    %162 = vst [vmem:[#allocation7] sm:$0xff] %v160
    // Predicated region
    $region10: #{tpu_custom_call.1} parent=1 // pred_check
      _
    $region11: #{tpu_custom_call.1} parent=1 // pred_check_branch
      %164 = sbr.rel (0) target = $region13
    $region12: #{tpu_custom_call.1} parent=1 // pred_region
      %s166 = ssub.s32 128, 128
      %167 = vsyncadd [#allocation6], %s166
      %s169 = sshll.u32 [#allocation7], 4
      %s170 = int_to_ptr.vmem [resolvable:$true] %s169
      %172 = dma.vmem_to_hbm [thread:$0]  %s170, 128, %s2, [#allocation6]
    $region13: #{tpu_custom_call.1} parent=1 // pred_fallthru
      _
    // Predicated region
    $region14: #{tpu_custom_call.1} parent=1 // pred_check
      _
    $region15: #{tpu_custom_call.1} parent=1 // pred_check_branch
      %174 = sbr.rel (0) target = $region17
    $region16: #{tpu_custom_call.1} parent=1 // pred_region
      %175 = dma.done [#allocation6], 128
    $region17: #{tpu_custom_call.1} parent=1 // pred_fallthru
      _
    %176 = vsyncpa [#allocation5], 1
    %177 = vsyncpa [#allocation6], 1

</llo_original>
